<compile_context>
chip_gen: v5e
topology: v5e:2x2
jax: 0.10.0
libtpu: 0.0.40
codegen_flags: <defaults>
</compile_context>

<pallas_src>
import math

import jax
import jax.numpy as jnp
from jax import lax
from jax.experimental import pallas as pl
from jax.experimental.pallas import tpu as pltpu


# ---------------------------------------------------------------------------
# Frozen sinusoidal table (exactly reproduces the PyTorch __init__)
# ---------------------------------------------------------------------------
def make_fixed_embedding_table(c_in: int, d_model: int) -> jnp.ndarray:
    position = jnp.arange(0, c_in, dtype=jnp.float32)[:, None]            # (c_in, 1)
    div_term = jnp.exp(
        jnp.arange(0, d_model, 2, dtype=jnp.float32)
        * -(math.log(10000.0) / d_model)
    )                                                                      # (d_model//2,)
    w = jnp.zeros((c_in, d_model), dtype=jnp.float32)
    w = w.at[:, 0::2].set(jnp.sin(position * div_term))
    w = w.at[:, 1::2].set(jnp.cos(position * div_term))
    return w


# ---------------------------------------------------------------------------
# Kernel (native (tokens, d_model) layout; g tokens packed per row when
# d_model < 128 so stores stay full-lane)
# ---------------------------------------------------------------------------
def _fixed_embedding_kernel(idx_ref, table_ref, out_ref):
    # idx_ref:   (tq_rows, g)          int32  combined codes  j*c_in + id
    # table_ref: (g*c_in, g*d_model)   f32    block-diagonal replicated table
    # out_ref:   (tq_rows, g*d_model)  f32    g token embeddings per row
    comb = idx_ref[...]                                                  # (tq_rows, g)
    tq_rows, g = comb.shape
    gc = table_ref.shape[0]

    # onehot[r, j*c_in + c] = (ids[r, j] == c); the g hit-sets are disjoint.
    pos = lax.broadcasted_iota(jnp.int32, (tq_rows, gc), 1)
    hit = pos == comb[:, 0:1]
    for j in range(1, g):                                                # g is tiny & static
        hit = jnp.logical_or(hit, pos == comb[:, j:j + 1])
    onehot = hit.astype(jnp.float32)                                     # (tq_rows, g*c_in)

    # (tq_rows, g*c_in) @ (g*c_in, g*d_model) on the MXU; HIGHEST keeps the
    # f32 table exact (no bf16 demotion) and is free here (HBM-bound, tiny K).
    out_ref[...] = jnp.dot(
        onehot, table_ref[...],
        preferred_element_type=jnp.float32,
        precision=lax.Precision.HIGHEST,
    )


# ---------------------------------------------------------------------------
# Tile-size / layout selection (generation-aware)
# ---------------------------------------------------------------------------
_LANE_ALIGN = 256          # MXU-friendly token alignment
_MAX_TQ_TOKENS = 8192      # absolute cap; VMEM budget is the real limiter


def _round_up(x: int, m: int) -> int:
    return ((x + m - 1) // m) * m


def _vmem_limit_bytes() -> int:
    phys = 64 * 1024 * 1024            # conservative default (v7x per-TC VMEM)
    try:
        phys = int(pltpu.get_tpu_info().vmem_capacity_bytes)
    except Exception:
        pass
    # ~112 MiB on v5e/v6e (128 MiB physical), 48 MiB on v7x (64 MiB physical).
    return int(max(32 * 1024 * 1024, min(phys - 16 * 1024 * 1024, 112 * 1024 * 1024)))


def _num_tensorcores() -> int:
    try:
        if "v7" in jax.devices()[0].device_kind.lower():
            return 2                   # v7x: 2 TensorCores per chip
    except Exception:
        pass
    return 1                           # v5e / v6e


def _choose_group(c_in: int, d_model: int) -> int:
    # Pack g consecutive tokens per output row so the output minor dim is a
    # full 128 lanes (unmasked vst) when d_model < 128.  Only when the layout
    # stays aligned and the block-diagonal matmul stays cheap.
    if 4 <= d_model < 128 and 128 % d_model == 0 and c_in <= 128:
        return 128 // d_model
    return 1


def _choose_tq(n_tokens: int, c_in: int, d_model: int, g: int,
               vmem_limit: int, num_cores: int) -> int:
    gc, gd = g * c_in, g * d_model
    align = max(_LANE_ALIGN, 8 * g)                 # tq_rows stays a multiple of 8
    budget = vmem_limit - 8 * 1024 * 1024           # headroom for temps / spills
    # Per g-token output row: double-buffered f32 output (gd), f32 one-hot (gc),
    # int32 indices (g), slack.
    per_row = 4 * (2 * gd + gc + g + 8)
    table_bytes = 2 * 4 * gc * gd                   # invariant block, 2 pipeline bufs
    rows_cap = max(1, (budget - table_bytes) // max(per_row, 1))
    tq = min(_MAX_TQ_TOKENS, (rows_cap * g // align) * align)
    tq = max(align, tq)
    # Never tile past the (padded) token count: small problems -> one grid step.
    tq = min(tq, _round_up(max(n_tokens, 1), align))
    # Only on multi-TC chips (v7x): keep >= ~4 grid steps so both cores get work.
    if num_cores > 1 and n_tokens >= 4 * align and pl.cdiv(n_tokens, tq) < 4:
        tq = max(align, _round_up(pl.cdiv(n_tokens, 4), align))
    return int(tq)


# ---------------------------------------------------------------------------
# Wrapper
# ---------------------------------------------------------------------------
def fixed_embedding_forward(x: jnp.ndarray, table: jnp.ndarray,
                            tq: int | None = None) -> jnp.ndarray:
    """x: (B, L) integer indices -> (B, L, d_model) float32 (== PyTorch emb(x))."""
    c_in, d_model = table.shape
    b, l = x.shape
    n = b * l

    g = _choose_group(c_in, d_model)
    vmem_limit = _vmem_limit_bytes()
    num_cores = _num_tensorcores()
    if tq is None:
        tq = _choose_tq(n, c_in, d_model, g, vmem_limit, num_cores)
    tq = _round_up(int(tq), 8 * g)                  # keep tq_rows sublane-aligned
    n_pad = _round_up(max(n, 1), tq)
    n_rows, tq_rows = n_pad // g, tq // g

    # Flat indices, zero-padded tail (padded tokens gather row 0, sliced off),
    # grouped g per row, with the per-slot c_in offset folded in so the kernel
    # indexes the block-diagonal table directly.
    flat = jnp.zeros((n_pad,), jnp.int32).at[:n].set(x.reshape(n).astype(jnp.int32))
    idx = flat.reshape(n_rows, g) + jnp.arange(g, dtype=jnp.int32)[None, :] * c_in

    table_f32 = jnp.asarray(table, dtype=jnp.float32)
    if g == 1:
        table_bd = table_f32
    else:
        table_bd = jnp.zeros((g * c_in, g * d_model), jnp.float32)
        for j in range(g):
            table_bd = table_bd.at[
                j * c_in:(j + 1) * c_in, j * d_model:(j + 1) * d_model
            ].set(table_f32)

    grid = (n_rows // tq_rows,)
    cost = pl.CostEstimate(
        flops=2 * n_rows * (g * c_in) * (g * d_model),
        transcendentals=0,
        bytes_accessed=4 * (n_pad * d_model + n_rows * g + (g * c_in) * (g * d_model)),
    )

    out = pl.pallas_call(
        _fixed_embedding_kernel,
        out_shape=jax.ShapeDtypeStruct((n_rows, g * d_model), jnp.float32),
        grid=grid,
        in_specs=[
            pl.BlockSpec((tq_rows, g), lambda i: (i, 0)),              # token-index tile
            pl.BlockSpec((g * c_in, g * d_model), lambda i: (0, 0)),   # invariant table
        ],
        out_specs=pl.BlockSpec((tq_rows, g * d_model), lambda i: (i, 0)),  # lane-dense
        compiler_params=pltpu.CompilerParams(
            dimension_semantics=("parallel",),
            vmem_limit_bytes=vmem_limit,
        ),
        cost_estimate=cost,
    )(idx, table_bd)

    # (n_rows, g*d_model) is bit-identical row-major to (n_pad, d_model): the
    # reshape is free; only the tail slice (if n_pad > n) copies a few rows.
    return out.reshape(n_pad, d_model)[:n].reshape(b, l, d_model)


# ---------------------------------------------------------------------------
# Self-test
# ---------------------------------------------------------------------------
if __name__ == "__main__":
    key = jax.random.PRNGKey(0)

    # Config 1: module-typical small shape (d_model < 128 -> grouped lane-dense path)
    c_in, d_model = 16, 32
    B, L = 2, 8
    table = make_fixed_embedding_table(c_in, d_model)
    k1, k2 = jax.random.split(key)
    x = jax.random.randint(k1, (B, L), minval=0, maxval=c_in, dtype=jnp.int32)
    out = jax.block_until_ready(fixed_embedding_forward(x, table))
    ref = table[x]                                   # == PyTorch self.emb(x).detach()
    assert out.shape == (B, L, d_model)
    assert out.dtype == jnp.float32
    assert jnp.allclose(out, ref, atol=1e-6), "mismatch vs reference gather (grouped path)"

    # Config 2: d_model >= 128 (plain native layout, g == 1 path)
    c_in2, d_model2 = 24, 128
    table2 = make_fixed_embedding_table(c_in2, d_model2)
    x2 = jax.random.randint(k2, (B, L), minval=0, maxval=c_in2, dtype=jnp.int32)
    out2 = jax.block_until_ready(fixed_embedding_forward(x2, table2))
    ref2 = table2[x2]
    assert out2.shape == (B, L, d_model2)
    assert jnp.allclose(out2, ref2, atol=1e-6), "mismatch vs reference gather (g=1 path)"

    print("KERNEL_OK")
</pallas_src>

<mosaic_0001>
module attributes {stable_mosaic.version = 11 : i64} {
  func.func @_fixed_embedding_kernel(%arg0: i32, %arg1: memref<64x4xi32, #tpu.memory_space<vmem>>, %arg2: memref<64x128xf32, #tpu.memory_space<vmem>>, %arg3: memref<64x128xf32, #tpu.memory_space<vmem>>) attributes {dimension_semantics = [#tpu.dimension_semantics<parallel>], iteration_bounds = array<i64: 1>, scalar_prefetch = 0 : i64, scratch_operands = 0 : i64, tpu.core_type = #tpu.core_type<tc>, window_params = [{transform_indices = @transform_0, window_bounds = array<i64: 64, 4>}, {pipeline_mode = #tpu.pipeline_mode<synchronous>, transform_indices = @transform_1, window_bounds = array<i64: 64, 128>}, {transform_indices = @transform_2, window_bounds = array<i64: 64, 128>}]} {
    %c0 = arith.constant 0 : index
    %c0_0 = arith.constant 0 : index
    %0 = vector.load %arg1[%c0, %c0_0] : memref<64x4xi32, #tpu.memory_space<vmem>>, vector<64x4xi32>
    %1 = tpu.iota {dimensions = array<i32: 1>} : vector<64x64xi32>
    %2 = vector.extract_strided_slice %0 {offsets = [0, 0], sizes = [64, 1], strides = [1, 1]} : vector<64x4xi32> to vector<64x1xi32>
    %3 = vector.broadcast %2 : vector<64x1xi32> to vector<64x64xi32>
    %4 = arith.cmpi eq, %1, %3 : vector<64x64xi32>
    %5 = vector.extract_strided_slice %0 {offsets = [0, 1], sizes = [64, 1], strides = [1, 1]} : vector<64x4xi32> to vector<64x1xi32>
    %6 = vector.broadcast %5 : vector<64x1xi32> to vector<64x64xi32>
    %7 = arith.cmpi eq, %1, %6 : vector<64x64xi32>
    %8 = arith.ori %4, %7 : vector<64x64xi1>
    %9 = vector.extract_strided_slice %0 {offsets = [0, 2], sizes = [64, 1], strides = [1, 1]} : vector<64x4xi32> to vector<64x1xi32>
    %10 = vector.broadcast %9 : vector<64x1xi32> to vector<64x64xi32>
    %11 = arith.cmpi eq, %1, %10 : vector<64x64xi32>
    %12 = arith.ori %8, %11 : vector<64x64xi1>
    %13 = vector.extract_strided_slice %0 {offsets = [0, 3], sizes = [64, 1], strides = [1, 1]} : vector<64x4xi32> to vector<64x1xi32>
    %14 = vector.broadcast %13 : vector<64x1xi32> to vector<64x64xi32>
    %15 = arith.cmpi eq, %1, %14 : vector<64x64xi32>
    %16 = arith.ori %12, %15 : vector<64x64xi1>
    %17 = arith.extui %16 : vector<64x64xi1> to vector<64x64xi32>
    %18 = arith.sitofp %17 : vector<64x64xi32> to vector<64x64xf32>
    %c0_1 = arith.constant 0 : index
    %c0_2 = arith.constant 0 : index
    %19 = vector.load %arg2[%c0_1, %c0_2] : memref<64x128xf32, #tpu.memory_space<vmem>>, vector<64x128xf32>
    %cst = arith.constant dense<0.000000e+00> : vector<64x128xf32>
    %20 = tpu.matmul %18, %19, %cst {dimension_numbers = #tpu.dot_dimension_numbers<[1], [0], [0], [1], [0, 0, 1, 1], [], []>, precision = #tpu.contract_precision<fp32>} : vector<64x64xf32>, vector<64x128xf32>, vector<64x128xf32> -> vector<64x128xf32>
    %c0_3 = arith.constant 0 : index
    %c0_4 = arith.constant 0 : index
    %21 = vector.load %arg3[%c0_3, %c0_4] : memref<64x128xf32, #tpu.memory_space<vmem>>, vector<64x128xf32>
    tpu.vector_store %arg3[%c0_3, %c0_4], %20 {strides = array<i32>} : memref<64x128xf32, #tpu.memory_space<vmem>>, vector<64x128xf32>,
    return
  }
  func.func @transform_0(%arg0: i32) -> (i32, i32) {
    %c0_i32 = arith.constant 0 : i32
    %c0_i32_0 = arith.constant 0 : i32
    return %arg0, %c0_i32 : i32, i32
  }
  func.func @transform_1(%arg0: i32) -> (i32, i32) {
    %c0_i32 = arith.constant 0 : i32
    %c0_i32_0 = arith.constant 0 : i32
    %c0_i32_1 = arith.constant 0 : i32
    return %c0_i32, %c0_i32_0 : i32, i32
  }
  func.func @transform_2(%arg0: i32) -> (i32, i32) {
    %c0_i32 = arith.constant 0 : i32
    %c0_i32_0 = arith.constant 0 : i32
    return %arg0, %c0_i32 : i32, i32
  }
}

</mosaic_0001>

<llo_original>
// kernel: tpu_custom_call.1
$region0: #{tpu_custom_call.1}
  #allocation0 [shape = 'u32[]', space=smem, size = 0x4, offset = 0x4, fixed_abs, tag = 'smem constant byte address 0x4 - core index']
  #allocation1 [shape = 'u32[72,128]{1,0:T(1,128)}', space=vmem, size = 0x9000, scoped, tag = 'internal scratch']
  %s0 = inlined_call_operand.vmem [shape: s32[64,4], index: 0, kind: input, shape index: {}]
  %s1 = inlined_call_operand.vmem [shape: f32[64,128], index: 1, kind: input, shape index: {}]
  %s2 = inlined_call_operand.hbm [shape: f32[64,128], index: 2, kind: output, shape index: {}]
  %s3 = sld [smem:[#allocation0]]
  $region18: #{tpu_custom_call.1} parent=0
    _
  %s5 = ssub.s32 1, %s3
  %s6 = scalar_select 0, %s5, %s3
  $region1: #{tpu_custom_call.1} parent=0
    #allocation2 [shape = 'u8[32768]{0}', space=vmem, size = 0x8000, scoped, tag = 'output window, operand 0, single buffered']
    #allocation3 [shape = 's32[1]{0}', space=sflag, size = 0x4, scoped, tag = 'scoped memory for tpu_custom_call.1']
    %7 = vsyncpa [#allocation3], 0
    // Predicated region
    $region2: #{tpu_custom_call.1} parent=1 // pred_check
      _
    $region3: #{tpu_custom_call.1} parent=1 // pred_check_branch
      %9 = sbr.rel (0) target = $region5
    $region4: #{tpu_custom_call.1} parent=1 // pred_region
      _
    $region5: #{tpu_custom_call.1} parent=1 // pred_fallthru
      _
    // Predicated region
    $region6: #{tpu_custom_call.1} parent=1 // pred_check
      _
    $region7: #{tpu_custom_call.1} parent=1 // pred_check_branch
      %11 = sbr.rel (0) target = $region9
    $region8: #{tpu_custom_call.1} parent=1 // pred_region
      _
    $region9: #{tpu_custom_call.1} parent=1 // pred_fallthru
      _
    %v12 = vld [vmem:[%s0] sm:$0xff]
    %v13 = vld [vmem:[%s0 + $0x8] sm:$0xff]
    %v14 = vld [vmem:[%s0 + $0x10] sm:$0xff]
    %v15 = vld [vmem:[%s0 + $0x18] sm:$0xff]
    %v16 = vld [vmem:[%s0 + $0x20] sm:$0xff]
    %v17 = vld [vmem:[%s0 + $0x28] sm:$0xff]
    %v18 = vld [vmem:[%s0 + $0x30] sm:$0xff]
    %v19 = vld [vmem:[%s0 + $0x38] sm:$0xff]
    %v20 = vlaneseq
    %v21 = vand.u32 %v20, 127
    %22 = vset.pattern.permute.xlu0 0
    %23 = vperm.xlu0 %22, %v12
    %v24 = vpop.permute.xlu0 %23
    %25 = vset.pattern.permute.xlu0 0
    %26 = vperm.xlu0 %25, %v13
    %v27 = vpop.permute.xlu0 %26
    %28 = vset.pattern.permute.xlu0 0
    %29 = vperm.xlu0 %28, %v14
    %v30 = vpop.permute.xlu0 %29
    %31 = vset.pattern.permute.xlu0 0
    %32 = vperm.xlu0 %31, %v15
    %v33 = vpop.permute.xlu0 %32
    %34 = vset.pattern.permute.xlu0 0
    %35 = vperm.xlu0 %34, %v16
    %v36 = vpop.permute.xlu0 %35
    %37 = vset.pattern.permute.xlu0 0
    %38 = vperm.xlu0 %37, %v17
    %v39 = vpop.permute.xlu0 %38
    %40 = vset.pattern.permute.xlu0 0
    %41 = vperm.xlu0 %40, %v18
    %v42 = vpop.permute.xlu0 %41
    %43 = vset.pattern.permute.xlu0 0
    %44 = vperm.xlu0 %43, %v19
    %v45 = vpop.permute.xlu0 %44
    %vm46 = vcmp.eq.s32.totalorder %v21, %v24
    %vm47 = vcmp.eq.s32.totalorder %v21, %v27
    %vm48 = vcmp.eq.s32.totalorder %v21, %v30
    %vm49 = vcmp.eq.s32.totalorder %v21, %v33
    %vm50 = vcmp.eq.s32.totalorder %v21, %v36
    %vm51 = vcmp.eq.s32.totalorder %v21, %v39
    %vm52 = vcmp.eq.s32.totalorder %v21, %v42
    %vm53 = vcmp.eq.s32.totalorder %v21, %v45
    %54 = vset.pattern.permute.xlu0 1
    %55 = vperm.xlu0 %54, %v12
    %v56 = vpop.permute.xlu0 %55
    %57 = vset.pattern.permute.xlu0 1
    %58 = vperm.xlu0 %57, %v13
    %v59 = vpop.permute.xlu0 %58
    %60 = vset.pattern.permute.xlu0 1
    %61 = vperm.xlu0 %60, %v14
    %v62 = vpop.permute.xlu0 %61
    %63 = vset.pattern.permute.xlu0 1
    %64 = vperm.xlu0 %63, %v15
    %v65 = vpop.permute.xlu0 %64
    %66 = vset.pattern.permute.xlu0 1
    %67 = vperm.xlu0 %66, %v16
    %v68 = vpop.permute.xlu0 %67
    %69 = vset.pattern.permute.xlu0 1
    %70 = vperm.xlu0 %69, %v17
    %v71 = vpop.permute.xlu0 %70
    %72 = vset.pattern.permute.xlu0 1
    %73 = vperm.xlu0 %72, %v18
    %v74 = vpop.permute.xlu0 %73
    %75 = vset.pattern.permute.xlu0 1
    %76 = vperm.xlu0 %75, %v19
    %v77 = vpop.permute.xlu0 %76
    %vm78 = vcmp.eq.s32.totalorder %v21, %v56
    %vm79 = vcmp.eq.s32.totalorder %v21, %v59
    %vm80 = vcmp.eq.s32.totalorder %v21, %v62
    %vm81 = vcmp.eq.s32.totalorder %v21, %v65
    %vm82 = vcmp.eq.s32.totalorder %v21, %v68
    %vm83 = vcmp.eq.s32.totalorder %v21, %v71
    %vm84 = vcmp.eq.s32.totalorder %v21, %v74
    %vm85 = vcmp.eq.s32.totalorder %v21, %v77
    %vm86 = vmor %vm46, %vm78
    %vm87 = vmor %vm47, %vm79
    %vm88 = vmor %vm48, %vm80
    %vm89 = vmor %vm49, %vm81
    %vm90 = vmor %vm50, %vm82
    %vm91 = vmor %vm51, %vm83
    %vm92 = vmor %vm52, %vm84
    %vm93 = vmor %vm53, %vm85
    %94 = vset.pattern.permute.xlu0 2
    %95 = vperm.xlu0 %94, %v12
    %v96 = vpop.permute.xlu0 %95
    %97 = vset.pattern.permute.xlu0 2
    %98 = vperm.xlu0 %97, %v13
    %v99 = vpop.permute.xlu0 %98
    %100 = vset.pattern.permute.xlu0 2
    %101 = vperm.xlu0 %100, %v14
    %v102 = vpop.permute.xlu0 %101
    %103 = vset.pattern.permute.xlu0 2
    %104 = vperm.xlu0 %103, %v15
    %v105 = vpop.permute.xlu0 %104
    %106 = vset.pattern.permute.xlu0 2
    %107 = vperm.xlu0 %106, %v16
    %v108 = vpop.permute.xlu0 %107
    %109 = vset.pattern.permute.xlu0 2
    %110 = vperm.xlu0 %109, %v17
    %v111 = vpop.permute.xlu0 %110
    %112 = vset.pattern.permute.xlu0 2
    %113 = vperm.xlu0 %112, %v18
    %v114 = vpop.permute.xlu0 %113
    %115 = vset.pattern.permute.xlu0 2
    %116 = vperm.xlu0 %115, %v19
    %v117 = vpop.permute.xlu0 %116
    %vm118 = vcmp.eq.s32.totalorder %v21, %v96
    %vm119 = vcmp.eq.s32.totalorder %v21, %v99
    %vm120 = vcmp.eq.s32.totalorder %v21, %v102
    %vm121 = vcmp.eq.s32.totalorder %v21, %v105
    %vm122 = vcmp.eq.s32.totalorder %v21, %v108
    %vm123 = vcmp.eq.s32.totalorder %v21, %v111
    %vm124 = vcmp.eq.s32.totalorder %v21, %v114
    %vm125 = vcmp.eq.s32.totalorder %v21, %v117
    %vm126 = vmor %vm86, %vm118
    %vm127 = vmor %vm87, %vm119
    %vm128 = vmor %vm88, %vm120
    %vm129 = vmor %vm89, %vm121
    %vm130 = vmor %vm90, %vm122
    %vm131 = vmor %vm91, %vm123
    %vm132 = vmor %vm92, %vm124
    %vm133 = vmor %vm93, %vm125
    %134 = vset.pattern.permute.xlu0 3
    %135 = vperm.xlu0 %134, %v12
    %v136 = vpop.permute.xlu0 %135
    %137 = vset.pattern.permute.xlu0 3
    %138 = vperm.xlu0 %137, %v13
    %v139 = vpop.permute.xlu0 %138
    %140 = vset.pattern.permute.xlu0 3
    %141 = vperm.xlu0 %140, %v14
    %v142 = vpop.permute.xlu0 %141
    %143 = vset.pattern.permute.xlu0 3
    %144 = vperm.xlu0 %143, %v15
    %v145 = vpop.permute.xlu0 %144
    %146 = vset.pattern.permute.xlu0 3
    %147 = vperm.xlu0 %146, %v16
    %v148 = vpop.permute.xlu0 %147
    %149 = vset.pattern.permute.xlu0 3
    %150 = vperm.xlu0 %149, %v17
    %v151 = vpop.permute.xlu0 %150
    %152 = vset.pattern.permute.xlu0 3
    %153 = vperm.xlu0 %152, %v18
    %v154 = vpop.permute.xlu0 %153
    %155 = vset.pattern.permute.xlu0 3
    %156 = vperm.xlu0 %155, %v19
    %v157 = vpop.permute.xlu0 %156
    %vm158 = vcmp.eq.s32.totalorder %v21, %v136
    %vm159 = vcmp.eq.s32.totalorder %v21, %v139
    %vm160 = vcmp.eq.s32.totalorder %v21, %v142
    %vm161 = vcmp.eq.s32.totalorder %v21, %v145
    %vm162 = vcmp.eq.s32.totalorder %v21, %v148
    %vm163 = vcmp.eq.s32.totalorder %v21, %v151
    %vm164 = vcmp.eq.s32.totalorder %v21, %v154
    %vm165 = vcmp.eq.s32.totalorder %v21, %v157
    %vm166 = vmor %vm126, %vm158
    %vm167 = vmor %vm127, %vm159
    %vm168 = vmor %vm128, %vm160
    %vm169 = vmor %vm129, %vm161
    %vm170 = vmor %vm130, %vm162
    %vm171 = vmor %vm131, %vm163
    %vm172 = vmor %vm132, %vm164
    %vm173 = vmor %vm133, %vm165
    %v174 = vsel %vm166, 1, 0
    %v175 = vsel %vm167, 1, 0
    %v176 = vsel %vm168, 1, 0
    %v177 = vsel %vm169, 1, 0
    %v178 = vsel %vm170, 1, 0
    %v179 = vsel %vm171, 1, 0
    %v180 = vsel %vm172, 1, 0
    %v181 = vsel %vm173, 1, 0
    %v182 = vcvt.s32.f32 %v174
    %v183 = vcvt.s32.f32 %v175
    %v184 = vcvt.s32.f32 %v176
    %v185 = vcvt.s32.f32 %v177
    %v186 = vcvt.s32.f32 %v178
    %v187 = vcvt.s32.f32 %v179
    %v188 = vcvt.s32.f32 %v180
    %v189 = vcvt.s32.f32 %v181
    %v190 = vld [vmem:[%s1] sm:$0xff]
    %v191 = vld [vmem:[%s1 + $0x8] sm:$0xff]
    %v192 = vld [vmem:[%s1 + $0x10] sm:$0xff]
    %v193 = vld [vmem:[%s1 + $0x18] sm:$0xff]
    %v194 = vld [vmem:[%s1 + $0x20] sm:$0xff]
    %v195 = vld [vmem:[%s1 + $0x28] sm:$0xff]
    %v196 = vld [vmem:[%s1 + $0x30] sm:$0xff]
    %v197 = vld [vmem:[%s1 + $0x38] sm:$0xff]
    %vm198 = vcmask 523264
    %v200 = vsel %vm198, %v182, 0
    %v203 = vsel %vm198, %v183, 0
    %v206 = vsel %vm198, %v184, 0
    %v209 = vsel %vm198, %v185, 0
    %v212 = vsel %vm198, %v186, 0
    %v215 = vsel %vm198, %v187, 0
    %v218 = vsel %vm198, %v188, 0
    %v221 = vsel %vm198, %v189, 0
    %223 = vmatpush.msra.mxu0 0.0
    %224 = vmatpush.msra.mxu0 0.0
    %225 = vmatpush.msra.mxu0 0.0
    %226 = vmatpush.msra.mxu0 0.0
    %227 = vmatpush.msra.mxu0 0.0
    %228 = vmatpush.msra.mxu0 0.0
    %229 = vmatpush.msra.mxu0 0.0
    %230 = vmatpush.msra.mxu0 0.0
    %v231 = vand.u32 %v197, 4294901760
    %232 = vmatpush.msra.mxu0 %v231
    %v233 = vand.u32 %v196, 4294901760
    %234 = vmatpush.msra.mxu0 %v233
    %v235 = vand.u32 %v195, 4294901760
    %236 = vmatpush.msra.mxu0 %v235
    %v237 = vand.u32 %v194, 4294901760
    %238 = vmatpush.msra.mxu0 %v237
    %v239 = vand.u32 %v193, 4294901760
    %240 = vmatpush.msra.mxu0 %v239
    %v241 = vand.u32 %v192, 4294901760
    %242 = vmatpush.msra.mxu0 %v241
    %v243 = vand.u32 %v191, 4294901760
    %244 = vmatpush.msra.mxu0 %v243
    %v245 = vand.u32 %v190, 4294901760
    %246 = vmatpush.msra.mxu0 %v245
    %v247 = vand.u32 %v200, 4294901760
    %v248 = vsub.f32 %v200, %v247
    %v249 = vand.u32 %v248, 4294901760
    %v250 = vsub.f32 %v248, %v249
    %v251 = vand.u32 %v250, 4294901760
    %252 = vmatmul.f32.gmra.mxu0 %v251
    %v253 = vpop.f32.mrf.mxu0
    %v254 = vadd.f32 0.0, %v253
    %v255 = vand.u32 %v203, 4294901760
    %v256 = vsub.f32 %v203, %v255
    %v257 = vand.u32 %v256, 4294901760
    %v258 = vsub.f32 %v256, %v257
    %v259 = vand.u32 %v258, 4294901760
    %260 = vmatmul.f32.gmra.mxu0 %v259
    %v261 = vpop.f32.mrf.mxu0
    %v262 = vadd.f32 0.0, %v261
    %v263 = vand.u32 %v206, 4294901760
    %v264 = vsub.f32 %v206, %v263
    %v265 = vand.u32 %v264, 4294901760
    %v266 = vsub.f32 %v264, %v265
    %v267 = vand.u32 %v266, 4294901760
    %268 = vmatmul.f32.gmra.mxu0 %v267
    %v269 = vpop.f32.mrf.mxu0
    %v270 = vadd.f32 0.0, %v269
    %v271 = vand.u32 %v209, 4294901760
    %v272 = vsub.f32 %v209, %v271
    %v273 = vand.u32 %v272, 4294901760
    %v274 = vsub.f32 %v272, %v273
    %v275 = vand.u32 %v274, 4294901760
    %276 = vmatmul.f32.gmra.mxu0 %v275
    %v277 = vpop.f32.mrf.mxu0
    %v278 = vadd.f32 0.0, %v277
    %v279 = vand.u32 %v212, 4294901760
    %v280 = vsub.f32 %v212, %v279
    %v281 = vand.u32 %v280, 4294901760
    %v282 = vsub.f32 %v280, %v281
    %v283 = vand.u32 %v282, 4294901760
    %284 = vmatmul.f32.gmra.mxu0 %v283
    %v285 = vpop.f32.mrf.mxu0
    %v286 = vadd.f32 0.0, %v285
    %v287 = vand.u32 %v215, 4294901760
    %v288 = vsub.f32 %v215, %v287
    %v289 = vand.u32 %v288, 4294901760
    %v290 = vsub.f32 %v288, %v289
    %v291 = vand.u32 %v290, 4294901760
    %292 = vmatmul.f32.gmra.mxu0 %v291
    %v293 = vpop.f32.mrf.mxu0
    %v294 = vadd.f32 0.0, %v293
    %v295 = vand.u32 %v218, 4294901760
    %v296 = vsub.f32 %v218, %v295
    %v297 = vand.u32 %v296, 4294901760
    %v298 = vsub.f32 %v296, %v297
    %v299 = vand.u32 %v298, 4294901760
    %300 = vmatmul.f32.gmra.mxu0 %v299
    %v301 = vpop.f32.mrf.mxu0
    %v302 = vadd.f32 0.0, %v301
    %v303 = vand.u32 %v221, 4294901760
    %v304 = vsub.f32 %v221, %v303
    %v305 = vand.u32 %v304, 4294901760
    %v306 = vsub.f32 %v304, %v305
    %v307 = vand.u32 %v306, 4294901760
    %308 = vmatmul.f32.gmra.mxu0 %v307
    %v309 = vpop.f32.mrf.mxu0
    %v310 = vadd.f32 0.0, %v309
    %311 = vdwg.mxu0
    %312 = vmatpush.msra.mxu0 0.0
    %313 = vmatpush.msra.mxu0 0.0
    %314 = vmatpush.msra.mxu0 0.0
    %315 = vmatpush.msra.mxu0 0.0
    %316 = vmatpush.msra.mxu0 0.0
    %317 = vmatpush.msra.mxu0 0.0
    %318 = vmatpush.msra.mxu0 0.0
    %319 = vmatpush.msra.mxu0 0.0
    %v320 = vand.u32 %v197, 4294901760
    %v321 = vsub.f32 %v197, %v320
    %v322 = vand.u32 %v321, 4294901760
    %v323 = vsub.f32 %v321, %v322
    %v324 = vand.u32 %v323, 4294901760
    %325 = vmatpush.msra.mxu0 %v324
    %v326 = vand.u32 %v196, 4294901760
    %v327 = vsub.f32 %v196, %v326
    %v328 = vand.u32 %v327, 4294901760
    %v329 = vsub.f32 %v327, %v328
    %v330 = vand.u32 %v329, 4294901760
    %331 = vmatpush.msra.mxu0 %v330
    %v332 = vand.u32 %v195, 4294901760
    %v333 = vsub.f32 %v195, %v332
    %v334 = vand.u32 %v333, 4294901760
    %v335 = vsub.f32 %v333, %v334
    %v336 = vand.u32 %v335, 4294901760
    %337 = vmatpush.msra.mxu0 %v336
    %v338 = vand.u32 %v194, 4294901760
    %v339 = vsub.f32 %v194, %v338
    %v340 = vand.u32 %v339, 4294901760
    %v341 = vsub.f32 %v339, %v340
    %v342 = vand.u32 %v341, 4294901760
    %343 = vmatpush.msra.mxu0 %v342
    %v344 = vand.u32 %v193, 4294901760
    %v345 = vsub.f32 %v193, %v344
    %v346 = vand.u32 %v345, 4294901760
    %v347 = vsub.f32 %v345, %v346
    %v348 = vand.u32 %v347, 4294901760
    %349 = vmatpush.msra.mxu0 %v348
    %v350 = vand.u32 %v192, 4294901760
    %v351 = vsub.f32 %v192, %v350
    %v352 = vand.u32 %v351, 4294901760
    %v353 = vsub.f32 %v351, %v352
    %v354 = vand.u32 %v353, 4294901760
    %355 = vmatpush.msra.mxu0 %v354
    %v356 = vand.u32 %v191, 4294901760
    %v357 = vsub.f32 %v191, %v356
    %v358 = vand.u32 %v357, 4294901760
    %v359 = vsub.f32 %v357, %v358
    %v360 = vand.u32 %v359, 4294901760
    %361 = vmatpush.msra.mxu0 %v360
    %v362 = vand.u32 %v190, 4294901760
    %v363 = vsub.f32 %v190, %v362
    %v364 = vand.u32 %v363, 4294901760
    %v365 = vsub.f32 %v363, %v364
    %v366 = vand.u32 %v365, 4294901760
    %367 = vmatpush.msra.mxu0 %v366
    %v368 = vand.u32 %v200, 4294901760
    %369 = vmatmul.f32.gmra.mxu0 %v368
    %v370 = vpop.f32.mrf.mxu0
    %v371 = vadd.f32 %v254, %v370
    %v372 = vand.u32 %v203, 4294901760
    %373 = vmatmul.f32.gmra.mxu0 %v372
    %v374 = vpop.f32.mrf.mxu0
    %v375 = vadd.f32 %v262, %v374
    %v376 = vand.u32 %v206, 4294901760
    %377 = vmatmul.f32.gmra.mxu0 %v376
    %v378 = vpop.f32.mrf.mxu0
    %v379 = vadd.f32 %v270, %v378
    %v380 = vand.u32 %v209, 4294901760
    %381 = vmatmul.f32.gmra.mxu0 %v380
    %v382 = vpop.f32.mrf.mxu0
    %v383 = vadd.f32 %v278, %v382
    %v384 = vand.u32 %v212, 4294901760
    %385 = vmatmul.f32.gmra.mxu0 %v384
    %v386 = vpop.f32.mrf.mxu0
    %v387 = vadd.f32 %v286, %v386
    %v388 = vand.u32 %v215, 4294901760
    %389 = vmatmul.f32.gmra.mxu0 %v388
    %v390 = vpop.f32.mrf.mxu0
    %v391 = vadd.f32 %v294, %v390
    %v392 = vand.u32 %v218, 4294901760
    %393 = vmatmul.f32.gmra.mxu0 %v392
    %v394 = vpop.f32.mrf.mxu0
    %v395 = vadd.f32 %v302, %v394
    %v396 = vand.u32 %v221, 4294901760
    %397 = vmatmul.f32.gmra.mxu0 %v396
    %v398 = vpop.f32.mrf.mxu0
    %v399 = vadd.f32 %v310, %v398
    %400 = vdwg.mxu0
    %401 = vmatpush.msra.mxu0 0.0
    %402 = vmatpush.msra.mxu0 0.0
    %403 = vmatpush.msra.mxu0 0.0
    %404 = vmatpush.msra.mxu0 0.0
    %405 = vmatpush.msra.mxu0 0.0
    %406 = vmatpush.msra.mxu0 0.0
    %407 = vmatpush.msra.mxu0 0.0
    %408 = vmatpush.msra.mxu0 0.0
    %v409 = vand.u32 %v197, 4294901760
    %v410 = vsub.f32 %v197, %v409
    %411 = vmatpush.msra.mxu0 %v410
    %v412 = vand.u32 %v196, 4294901760
    %v413 = vsub.f32 %v196, %v412
    %414 = vmatpush.msra.mxu0 %v413
    %v415 = vand.u32 %v195, 4294901760
    %v416 = vsub.f32 %v195, %v415
    %417 = vmatpush.msra.mxu0 %v416
    %v418 = vand.u32 %v194, 4294901760
    %v419 = vsub.f32 %v194, %v418
    %420 = vmatpush.msra.mxu0 %v419
    %v421 = vand.u32 %v193, 4294901760
    %v422 = vsub.f32 %v193, %v421
    %423 = vmatpush.msra.mxu0 %v422
    %v424 = vand.u32 %v192, 4294901760
    %v425 = vsub.f32 %v192, %v424
    %426 = vmatpush.msra.mxu0 %v425
    %v427 = vand.u32 %v191, 4294901760
    %v428 = vsub.f32 %v191, %v427
    %429 = vmatpush.msra.mxu0 %v428
    %v430 = vand.u32 %v190, 4294901760
    %v431 = vsub.f32 %v190, %v430
    %432 = vmatpush.msra.mxu0 %v431
    %v433 = vand.u32 %v200, 4294901760
    %v434 = vsub.f32 %v200, %v433
    %435 = vmatmul.f32.gmra.mxu0 %v434
    %v436 = vpop.f32.mrf.mxu0
    %v437 = vadd.f32 %v371, %v436
    %v438 = vand.u32 %v203, 4294901760
    %v439 = vsub.f32 %v203, %v438
    %440 = vmatmul.f32.gmra.mxu0 %v439
    %v441 = vpop.f32.mrf.mxu0
    %v442 = vadd.f32 %v375, %v441
    %v443 = vand.u32 %v206, 4294901760
    %v444 = vsub.f32 %v206, %v443
    %445 = vmatmul.f32.gmra.mxu0 %v444
    %v446 = vpop.f32.mrf.mxu0
    %v447 = vadd.f32 %v379, %v446
    %v448 = vand.u32 %v209, 4294901760
    %v449 = vsub.f32 %v209, %v448
    %450 = vmatmul.f32.gmra.mxu0 %v449
    %v451 = vpop.f32.mrf.mxu0
    %v452 = vadd.f32 %v383, %v451
    %v453 = vand.u32 %v212, 4294901760
    %v454 = vsub.f32 %v212, %v453
    %455 = vmatmul.f32.gmra.mxu0 %v454
    %v456 = vpop.f32.mrf.mxu0
    %v457 = vadd.f32 %v387, %v456
    %v458 = vand.u32 %v215, 4294901760
    %v459 = vsub.f32 %v215, %v458
    %460 = vmatmul.f32.gmra.mxu0 %v459
    %v461 = vpop.f32.mrf.mxu0
    %v462 = vadd.f32 %v391, %v461
    %v463 = vand.u32 %v218, 4294901760
    %v464 = vsub.f32 %v218, %v463
    %465 = vmatmul.f32.gmra.mxu0 %v464
    %v466 = vpop.f32.mrf.mxu0
    %v467 = vadd.f32 %v395, %v466
    %v468 = vand.u32 %v221, 4294901760
    %v469 = vsub.f32 %v221, %v468
    %470 = vmatmul.f32.gmra.mxu0 %v469
    %v471 = vpop.f32.mrf.mxu0
    %v472 = vadd.f32 %v399, %v471
    %473 = vdwg.mxu0
    %474 = vmatpush.msra.mxu0 0.0
    %475 = vmatpush.msra.mxu0 0.0
    %476 = vmatpush.msra.mxu0 0.0
    %477 = vmatpush.msra.mxu0 0.0
    %478 = vmatpush.msra.mxu0 0.0
    %479 = vmatpush.msra.mxu0 0.0
    %480 = vmatpush.msra.mxu0 0.0
    %481 = vmatpush.msra.mxu0 0.0
    %v482 = vand.u32 %v197, 4294901760
    %483 = vmatpush.msra.mxu0 %v482
    %v484 = vand.u32 %v196, 4294901760
    %485 = vmatpush.msra.mxu0 %v484
    %v486 = vand.u32 %v195, 4294901760
    %487 = vmatpush.msra.mxu0 %v486
    %v488 = vand.u32 %v194, 4294901760
    %489 = vmatpush.msra.mxu0 %v488
    %v490 = vand.u32 %v193, 4294901760
    %491 = vmatpush.msra.mxu0 %v490
    %v492 = vand.u32 %v192, 4294901760
    %493 = vmatpush.msra.mxu0 %v492
    %v494 = vand.u32 %v191, 4294901760
    %495 = vmatpush.msra.mxu0 %v494
    %v496 = vand.u32 %v190, 4294901760
    %497 = vmatpush.msra.mxu0 %v496
    %v498 = vand.u32 %v200, 4294901760
    %v499 = vsub.f32 %v200, %v498
    %v500 = vand.u32 %v499, 4294901760
    %501 = vmatmul.f32.gmra.mxu0 %v500
    %v502 = vpop.f32.mrf.mxu0
    %v503 = vadd.f32 %v437, %v502
    %v504 = vand.u32 %v203, 4294901760
    %v505 = vsub.f32 %v203, %v504
    %v506 = vand.u32 %v505, 4294901760
    %507 = vmatmul.f32.gmra.mxu0 %v506
    %v508 = vpop.f32.mrf.mxu0
    %v509 = vadd.f32 %v442, %v508
    %v510 = vand.u32 %v206, 4294901760
    %v511 = vsub.f32 %v206, %v510
    %v512 = vand.u32 %v511, 4294901760
    %513 = vmatmul.f32.gmra.mxu0 %v512
    %v514 = vpop.f32.mrf.mxu0
    %v515 = vadd.f32 %v447, %v514
    %v516 = vand.u32 %v209, 4294901760
    %v517 = vsub.f32 %v209, %v516
    %v518 = vand.u32 %v517, 4294901760
    %519 = vmatmul.f32.gmra.mxu0 %v518
    %v520 = vpop.f32.mrf.mxu0
    %v521 = vadd.f32 %v452, %v520
    %v522 = vand.u32 %v212, 4294901760
    %v523 = vsub.f32 %v212, %v522
    %v524 = vand.u32 %v523, 4294901760
    %525 = vmatmul.f32.gmra.mxu0 %v524
    %v526 = vpop.f32.mrf.mxu0
    %v527 = vadd.f32 %v457, %v526
    %v528 = vand.u32 %v215, 4294901760
    %v529 = vsub.f32 %v215, %v528
    %v530 = vand.u32 %v529, 4294901760
    %531 = vmatmul.f32.gmra.mxu0 %v530
    %v532 = vpop.f32.mrf.mxu0
    %v533 = vadd.f32 %v462, %v532
    %v534 = vand.u32 %v218, 4294901760
    %v535 = vsub.f32 %v218, %v534
    %v536 = vand.u32 %v535, 4294901760
    %537 = vmatmul.f32.gmra.mxu0 %v536
    %v538 = vpop.f32.mrf.mxu0
    %v539 = vadd.f32 %v467, %v538
    %v540 = vand.u32 %v221, 4294901760
    %v541 = vsub.f32 %v221, %v540
    %v542 = vand.u32 %v541, 4294901760
    %543 = vmatmul.f32.gmra.mxu0 %v542
    %v544 = vpop.f32.mrf.mxu0
    %v545 = vadd.f32 %v472, %v544
    %546 = vdwg.mxu0
    %547 = vmatpush.msra.mxu0 0.0
    %548 = vmatpush.msra.mxu0 0.0
    %549 = vmatpush.msra.mxu0 0.0
    %550 = vmatpush.msra.mxu0 0.0
    %551 = vmatpush.msra.mxu0 0.0
    %552 = vmatpush.msra.mxu0 0.0
    %553 = vmatpush.msra.mxu0 0.0
    %554 = vmatpush.msra.mxu0 0.0
    %v555 = vand.u32 %v197, 4294901760
    %v556 = vsub.f32 %v197, %v555
    %v557 = vand.u32 %v556, 4294901760
    %558 = vmatpush.msra.mxu0 %v557
    %v559 = vand.u32 %v196, 4294901760
    %v560 = vsub.f32 %v196, %v559
    %v561 = vand.u32 %v560, 4294901760
    %562 = vmatpush.msra.mxu0 %v561
    %v563 = vand.u32 %v195, 4294901760
    %v564 = vsub.f32 %v195, %v563
    %v565 = vand.u32 %v564, 4294901760
    %566 = vmatpush.msra.mxu0 %v565
    %v567 = vand.u32 %v194, 4294901760
    %v568 = vsub.f32 %v194, %v567
    %v569 = vand.u32 %v568, 4294901760
    %570 = vmatpush.msra.mxu0 %v569
    %v571 = vand.u32 %v193, 4294901760
    %v572 = vsub.f32 %v193, %v571
    %v573 = vand.u32 %v572, 4294901760
    %574 = vmatpush.msra.mxu0 %v573
    %v575 = vand.u32 %v192, 4294901760
    %v576 = vsub.f32 %v192, %v575
    %v577 = vand.u32 %v576, 4294901760
    %578 = vmatpush.msra.mxu0 %v577
    %v579 = vand.u32 %v191, 4294901760
    %v580 = vsub.f32 %v191, %v579
    %v581 = vand.u32 %v580, 4294901760
    %582 = vmatpush.msra.mxu0 %v581
    %v583 = vand.u32 %v190, 4294901760
    %v584 = vsub.f32 %v190, %v583
    %v585 = vand.u32 %v584, 4294901760
    %586 = vmatpush.msra.mxu0 %v585
    %v587 = vand.u32 %v200, 4294901760
    %588 = vmatmul.f32.gmra.mxu0 %v587
    %v589 = vpop.f32.mrf.mxu0
    %v590 = vadd.f32 %v503, %v589
    %v591 = vand.u32 %v203, 4294901760
    %592 = vmatmul.f32.gmra.mxu0 %v591
    %v593 = vpop.f32.mrf.mxu0
    %v594 = vadd.f32 %v509, %v593
    %v595 = vand.u32 %v206, 4294901760
    %596 = vmatmul.f32.gmra.mxu0 %v595
    %v597 = vpop.f32.mrf.mxu0
    %v598 = vadd.f32 %v515, %v597
    %v599 = vand.u32 %v209, 4294901760
    %600 = vmatmul.f32.gmra.mxu0 %v599
    %v601 = vpop.f32.mrf.mxu0
    %v602 = vadd.f32 %v521, %v601
    %v603 = vand.u32 %v212, 4294901760
    %604 = vmatmul.f32.gmra.mxu0 %v603
    %v605 = vpop.f32.mrf.mxu0
    %v606 = vadd.f32 %v527, %v605
    %v607 = vand.u32 %v215, 4294901760
    %608 = vmatmul.f32.gmra.mxu0 %v607
    %v609 = vpop.f32.mrf.mxu0
    %v610 = vadd.f32 %v533, %v609
    %v611 = vand.u32 %v218, 4294901760
    %612 = vmatmul.f32.gmra.mxu0 %v611
    %v613 = vpop.f32.mrf.mxu0
    %v614 = vadd.f32 %v539, %v613
    %v615 = vand.u32 %v221, 4294901760
    %616 = vmatmul.f32.gmra.mxu0 %v615
    %v617 = vpop.f32.mrf.mxu0
    %v618 = vadd.f32 %v545, %v617
    %619 = vdwg.mxu0
    %620 = vmatpush.msra.mxu0 0.0
    %621 = vmatpush.msra.mxu0 0.0
    %622 = vmatpush.msra.mxu0 0.0
    %623 = vmatpush.msra.mxu0 0.0
    %624 = vmatpush.msra.mxu0 0.0
    %625 = vmatpush.msra.mxu0 0.0
    %626 = vmatpush.msra.mxu0 0.0
    %627 = vmatpush.msra.mxu0 0.0
    %v628 = vand.u32 %v197, 4294901760
    %629 = vmatpush.msra.mxu0 %v628
    %v630 = vand.u32 %v196, 4294901760
    %631 = vmatpush.msra.mxu0 %v630
    %v632 = vand.u32 %v195, 4294901760
    %633 = vmatpush.msra.mxu0 %v632
    %v634 = vand.u32 %v194, 4294901760
    %635 = vmatpush.msra.mxu0 %v634
    %v636 = vand.u32 %v193, 4294901760
    %637 = vmatpush.msra.mxu0 %v636
    %v638 = vand.u32 %v192, 4294901760
    %639 = vmatpush.msra.mxu0 %v638
    %v640 = vand.u32 %v191, 4294901760
    %641 = vmatpush.msra.mxu0 %v640
    %v642 = vand.u32 %v190, 4294901760
    %643 = vmatpush.msra.mxu0 %v642
    %v644 = vand.u32 %v200, 4294901760
    %645 = vmatmul.f32.gmra.mxu0 %v644
    %v646 = vpop.f32.mrf.mxu0
    %v647 = vadd.f32 %v590, %v646
    %v648 = vand.u32 %v203, 4294901760
    %649 = vmatmul.f32.gmra.mxu0 %v648
    %v650 = vpop.f32.mrf.mxu0
    %v651 = vadd.f32 %v594, %v650
    %v652 = vand.u32 %v206, 4294901760
    %653 = vmatmul.f32.gmra.mxu0 %v652
    %v654 = vpop.f32.mrf.mxu0
    %v655 = vadd.f32 %v598, %v654
    %v656 = vand.u32 %v209, 4294901760
    %657 = vmatmul.f32.gmra.mxu0 %v656
    %v658 = vpop.f32.mrf.mxu0
    %v659 = vadd.f32 %v602, %v658
    %v660 = vand.u32 %v212, 4294901760
    %661 = vmatmul.f32.gmra.mxu0 %v660
    %v662 = vpop.f32.mrf.mxu0
    %v663 = vadd.f32 %v606, %v662
    %v664 = vand.u32 %v215, 4294901760
    %665 = vmatmul.f32.gmra.mxu0 %v664
    %v666 = vpop.f32.mrf.mxu0
    %v667 = vadd.f32 %v610, %v666
    %v668 = vand.u32 %v218, 4294901760
    %669 = vmatmul.f32.gmra.mxu0 %v668
    %v670 = vpop.f32.mrf.mxu0
    %v671 = vadd.f32 %v614, %v670
    %v672 = vand.u32 %v221, 4294901760
    %673 = vmatmul.f32.gmra.mxu0 %v672
    %v674 = vpop.f32.mrf.mxu0
    %v675 = vadd.f32 %v618, %v674
    %676 = vdwg.mxu0
    %677 = vst [vmem:[#allocation2] sm:$0xff] %v647
    %678 = vst [vmem:[#allocation2 + $0x8] sm:$0xff] %v651
    %679 = vst [vmem:[#allocation2 + $0x10] sm:$0xff] %v655
    %680 = vst [vmem:[#allocation2 + $0x18] sm:$0xff] %v659
    %681 = vst [vmem:[#allocation2 + $0x20] sm:$0xff] %v663
    %682 = vst [vmem:[#allocation2 + $0x28] sm:$0xff] %v667
    %683 = vst [vmem:[#allocation2 + $0x30] sm:$0xff] %v671
    %684 = vst [vmem:[#allocation2 + $0x38] sm:$0xff] %v675
    // Predicated region
    $region10: #{tpu_custom_call.1} parent=1 // pred_check
      _
    $region11: #{tpu_custom_call.1} parent=1 // pred_check_branch
      %686 = sbr.rel (0) target = $region13
    $region12: #{tpu_custom_call.1} parent=1 // pred_region
      %688 = vsyncadd [#allocation3], 0
      %s689 = sshll.u32 [#allocation2], 4
      %s690 = int_to_ptr.vmem [resolvable:$true] %s689
      %s691 = sshll.u32 %s2, 4
      %s692 = int_to_ptr.hbm [resolvable:$true] %s691
      %697 = dma.vmem_to_hbm [thread:$0]  %s690, 1024, %s692, [#allocation3], 128, 128, 8
    $region13: #{tpu_custom_call.1} parent=1 // pred_fallthru
      _
    // Predicated region
    $region14: #{tpu_custom_call.1} parent=1 // pred_check
      _
    $region15: #{tpu_custom_call.1} parent=1 // pred_check_branch
      %699 = sbr.rel (0) target = $region17
    $region16: #{tpu_custom_call.1} parent=1 // pred_region
      %701 = dma.done [#allocation3], 1024
    $region17: #{tpu_custom_call.1} parent=1 // pred_fallthru
      _
    %702 = vsyncpa [#allocation3], 1

</llo_original>
